<compile_context>
chip_gen: v7x
topology: tpu7x:2x2x1
jax: 0.10.0
libtpu: 0.0.40
codegen_flags: <defaults>
</compile_context>

<pallas_src>
import functools

import numpy as np
import jax
import jax.numpy as jnp
from jax.experimental import pallas as pl
from jax.experimental.pallas import tpu as pltpu


# ----------------------------------------------------------------------------
# Host-side constant builders (exact, tiny; folded at trace time)
# ----------------------------------------------------------------------------
def _bilinear_matrix(out_size, in_size, align_corners):
    """(out_size, in_size) matrix M with y_out = M @ y_in == torch bilinear."""
    if align_corners:
        # out_size == 1 -> linspace returns [0.0], matching torch's scale = 0.
        src = np.linspace(0.0, in_size - 1, out_size)
    else:
        src = (np.arange(out_size) + 0.5) * (in_size / out_size) - 0.5
        src = np.clip(src, 0.0, in_size - 1)
    i0 = np.floor(src).astype(np.int64)
    i1 = np.minimum(i0 + 1, in_size - 1)
    w1 = src - i0
    m = np.zeros((out_size, in_size), np.float64)
    m[np.arange(out_size), i0] += 1.0 - w1
    m[np.arange(out_size), i1] += w1
    return m.astype(np.float32)


def _shifted_stack(m):
    """m:(S,T) -> (3,S,T); slice d is m shifted by (d-1) rows, zero padded.

    Implements the 3x3 conv's padding=1 taps fused into the upsample matrix.
    """
    s, _ = m.shape
    pad = np.zeros((s + 2, m.shape[1]), np.float32)
    pad[1:1 + s] = m
    return np.stack([pad[d:d + s] for d in range(3)])


# ----------------------------------------------------------------------------
# Pallas kernel: whole SegHeader per batch block as 4 lane-dense MXU matmuls
# ----------------------------------------------------------------------------
def _seg_head_kernel(z_ref, kcat_ref, bbig_ref, b1_ref, wft_ref, rxbig_ref,
                     b2_ref, o_ref, tstack_ref):
    bbw = z_ref.shape[0]              # B_blk * W
    n1 = kcat_ref.shape[1] // 3       # Cf * H2

    # Stage 1a: fat lane-expanding matmul, N = 3*Cf*H2 (bf16 x bf16 -> f32).
    t = jnp.dot(z_ref[...], kcat_ref[...], preferred_element_type=jnp.float32)

    # Restack the three dx lane-slices (256-lane aligned) onto the sublane
    # axis via a VMEM scratch; static unroll, 3 cheap copies.
    for dx in range(3):
        tstack_ref[dx * bbw:(dx + 1) * bbw, :] = (
            t[:, dx * n1:(dx + 1) * n1].astype(tstack_ref.dtype))

    # Stage 1b: all three conv taps + x2 W-upsample fused in ONE matmul
    # (K = 3*B*W), then conv bias + ReLU in f32.
    h = jnp.dot(bbig_ref[...], tstack_ref[...],
                preferred_element_type=jnp.float32)
    h = jnp.maximum(h + b1_ref[...], 0.0)

    # Stage 2: 1x1 conv fused with the H-resize (N = Cout*Hn, lane dense).
    p = jnp.dot(h.astype(wft_ref.dtype), wft_ref[...],
                preferred_element_type=jnp.float32)

    # Stage 3: W-resize (block-diag over the batch block) + output bias.
    y = jnp.dot(rxbig_ref[...], p.astype(rxbig_ref.dtype),
                preferred_element_type=jnp.float32)
    o_ref[...] = (y + b2_ref[...]).astype(o_ref.dtype)   # lane-dense store


# ----------------------------------------------------------------------------
# SegHeader forward
# ----------------------------------------------------------------------------
@functools.partial(jax.jit,
                   static_argnames=("net_h", "net_w", "align_corners",
                                    "block_batch"))
def seg_header_forward(x_nchw, params, *, net_h, net_w, align_corners=False,
                       block_batch=None):
    n, c, h, w = x_nchw.shape
    h2, w2 = 2 * h, 2 * w
    cf = params["w1"].shape[-1]
    cout = params["w2"].shape[-1]

    # ---- batch blocking: amortize per-step overhead, keep >= 2 grid steps ---
    if block_batch is None:
        bb = 1
        for cand in (8, 4, 2):
            if n % cand == 0 and n // cand >= 2:
                bb = cand
                break
    else:
        bb = int(block_batch)
    assert n % bb == 0, (n, bb)
    grid_n = n // bb

    # ---- shape-only constants (numpy, exact) --------------------------------
    uy = _bilinear_matrix(h2, h, align_corners)              # (H2, H)
    ux = _bilinear_matrix(w2, w, align_corners)              # (W2, W)
    ry = _bilinear_matrix(net_h, h2, align_corners)          # (Hn, H2)
    rx = _bilinear_matrix(net_w, w2, align_corners)          # (Wn, W2)
    a_dy = _shifted_stack(uy)                                # (3, H2, H)
    b_dx = _shifted_stack(ux)                                # (3, W2, W)

    # ---- fold trained weights into transposed matmul operands ---------------
    w1 = params["w1"].astype(jnp.float32)                    # (3,3,C,Cf) HWIO
    w2p = params["w2"].astype(jnp.float32)                   # (Cf, Cout)
    b1 = params["b1"].reshape(-1).astype(jnp.float32)        # (Cf,)
    b2 = params["b2"].reshape(-1).astype(jnp.float32)        # (Cout,)

    # Kcat^T[(c,y), (dx,f,Y)] = sum_dy w1[dy,dx,c,f] * A_dy[Y,y]
    kcat_t = jnp.einsum("decf,dYy->cyefY", w1,
                        jnp.asarray(a_dy)).reshape(c * h, 3 * cf * h2)
    kcat_t = kcat_t.astype(jnp.bfloat16)

    # wf^T[(f,Y), (o,Q)] = w2[f,o] * Ry[Q,Y]  (1x1 conv fused with H-resize;
    # the bias commutes because bilinear rows sum to 1).
    wft = jnp.einsum("fo,QY->fYoQ", w2p,
                     jnp.asarray(ry)).reshape(cf * h2, cout * net_h)
    wft = wft.astype(jnp.bfloat16)
    # TODO(synk): for production-size net_h, tile wft over Hn with an extra grid
    # axis (or un-fuse the H-resize into its own matmul) before it outgrows VMEM.

    # Batch-block-diagonal W-axis transforms (trace-time numpy constants).
    # Bbig[(b,wq), (dx,b',wi)] = delta(b,b') * B_dx[wq,wi]
    bbig_np = np.zeros((bb * w2, 3 * bb * w), np.float32)
    for dx in range(3):
        for bi in range(bb):
            bbig_np[bi * w2:(bi + 1) * w2,
                    dx * bb * w + bi * w:dx * bb * w + (bi + 1) * w] = b_dx[dx]
    bbig = jnp.asarray(bbig_np, jnp.bfloat16)

    # Rxbig[(b,wp), (b',wq)] = delta(b,b') * Rx[wp,wq]
    rxbig_np = np.zeros((bb * net_w, bb * w2), np.float32)
    for bi in range(bb):
        rxbig_np[bi * net_w:(bi + 1) * net_w, bi * w2:(bi + 1) * w2] = rx
    rxbig = jnp.asarray(rxbig_np, jnp.bfloat16)

    # Lane-dense (1, X) bias rows, f32 (added to the f32 accumulators).
    b1_row = jnp.repeat(b1, h2)[None, :]                     # (1, Cf*H2)
    b2_row = jnp.repeat(b2, net_h)[None, :]                  # (1, Cout*Hn)

    # Input as z: rows=(b, w), cols=(c, h); bf16 halves the input DMA.
    z = jnp.transpose(x_nchw, (0, 3, 1, 2)).reshape(n * w, c * h)
    z = z.astype(jnp.bfloat16)

    # ---- VMEM guardrail (invariant operands are double-buffered) ------------
    inv_bytes = (kcat_t.size + wft.size + bbig.size + rxbig.size) * 2 \
        + (b1_row.size + b2_row.size) * 4
    io_bytes = bb * w * c * h * 2 + bb * net_w * cout * net_h * 4
    scratch_bytes = 3 * bb * w * cf * h2 * 2
    vmem_need = 2 * (inv_bytes + io_bytes) + scratch_bytes + (2 << 20)
    vmem_limit = int(min(max(vmem_need, 32 << 20), 64 << 20))

    out_flat = pl.pallas_call(
        _seg_head_kernel,
        out_shape=jax.ShapeDtypeStruct((n * net_w, cout * net_h), jnp.float32),
        grid=(grid_n,),
        in_specs=[
            pl.BlockSpec((bb * w, c * h), lambda i: (i, 0)),
            pl.BlockSpec((c * h, 3 * cf * h2), lambda i: (0, 0)),
            pl.BlockSpec((bb * w2, 3 * bb * w), lambda i: (0, 0)),
            pl.BlockSpec((1, cf * h2), lambda i: (0, 0)),
            pl.BlockSpec((cf * h2, cout * net_h), lambda i: (0, 0)),
            pl.BlockSpec((bb * net_w, bb * w2), lambda i: (0, 0)),
            pl.BlockSpec((1, cout * net_h), lambda i: (0, 0)),
        ],
        out_specs=pl.BlockSpec((bb * net_w, cout * net_h), lambda i: (i, 0)),
        scratch_shapes=[pltpu.VMEM((3 * bb * w, cf * h2), jnp.bfloat16)],
        compiler_params=pltpu.CompilerParams(
            dimension_semantics=("parallel",),
            vmem_limit_bytes=vmem_limit),
    )(z, kcat_t, bbig, b1_row, wft, rxbig, b2_row)

    # Un-transpose in the wrapper: (N*Wn, Cout*Hn) -> (N, Cout, Hn, Wn).
    # (Output kept f32; switch to bf16 here + in out_shape if downstream allows.)
    out = out_flat.reshape(n, net_w, cout, net_h)
    return jnp.transpose(out, (0, 2, 3, 1))


# ----------------------------------------------------------------------------
# Pure-JAX reference (gather-based resizes + XLA conv) for correctness check
# ----------------------------------------------------------------------------
def _bilinear_resize_nhwc(x, out_h, out_w, align_corners):
    n, h, w, c = x.shape
    if align_corners:
        ys = jnp.linspace(0.0, float(h - 1), out_h, dtype=jnp.float32)
        xs = jnp.linspace(0.0, float(w - 1), out_w, dtype=jnp.float32)
    else:
        ys = (jnp.arange(out_h, dtype=jnp.float32) + 0.5) * (h / out_h) - 0.5
        xs = (jnp.arange(out_w, dtype=jnp.float32) + 0.5) * (w / out_w) - 0.5
        ys = jnp.clip(ys, 0.0, float(h - 1))
        xs = jnp.clip(xs, 0.0, float(w - 1))
    y0 = jnp.floor(ys).astype(jnp.int32)
    x0 = jnp.floor(xs).astype(jnp.int32)
    y1 = jnp.minimum(y0 + 1, h - 1)
    x1 = jnp.minimum(x0 + 1, w - 1)
    wy = (ys - y0.astype(jnp.float32))[None, :, None, None]
    wx = (xs - x0.astype(jnp.float32))[None, None, :, None]
    top_l = x[:, y0][:, :, x0]
    top_r = x[:, y0][:, :, x1]
    bot_l = x[:, y1][:, :, x0]
    bot_r = x[:, y1][:, :, x1]
    top = top_l * (1.0 - wx) + top_r * wx
    bot = bot_l * (1.0 - wx) + bot_r * wx
    return top * (1.0 - wy) + bot * wy


def _ref_forward(x_nchw, params, *, net_h, net_w, align_corners=False):
    x = jnp.transpose(x_nchw, (0, 2, 3, 1))
    n, h, w, c = x.shape
    x_up = _bilinear_resize_nhwc(x, 2 * h, 2 * w, align_corners)
    y = jax.lax.conv_general_dilated(
        x_up, params["w1"], window_strides=(1, 1), padding="SAME",
        dimension_numbers=("NHWC", "HWIO", "NHWC")) + params["b1"].reshape(-1)
    y = jnp.maximum(y, 0.0)
    y = jnp.einsum("nhwf,fo->nhwo", y, params["w2"]) + params["b2"].reshape(-1)
    y = _bilinear_resize_nhwc(y, net_h, net_w, align_corners)
    return jnp.transpose(y, (0, 3, 1, 2))


def _init_params(key, in_channel, feat_channel, out_channel):
    k1, k2, k3, k4 = jax.random.split(key, 4)
    return {
        "w1": 0.1 * jax.random.normal(k1, (3, 3, in_channel, feat_channel),
                                      jnp.float32),
        "b1": 0.1 * jax.random.normal(k2, (1, feat_channel), jnp.float32),
        "w2": 0.1 * jax.random.normal(k3, (feat_channel, out_channel),
                                      jnp.float32),
        "b2": 0.1 * jax.random.normal(k4, (1, out_channel), jnp.float32),
    }


if __name__ == "__main__":
    # synthetic cfg: backbone channels=4, feat_channel=8, 3 classes,
    #                network input 64x64
    in_channel, feat_channel, out_channel = 4, 8, 3
    net_h, net_w = 64, 64

    key = jax.random.PRNGKey(0)
    kx1, kx2, kp = jax.random.split(key, 3)
    params = _init_params(kp, in_channel, feat_channel, out_channel)

    # (batch=2, align_corners=False): grid of 2 single-sample steps (v7x 2 TCs).
    # (batch=8, align_corners=True): exercises batch blocking (4 samples/step).
    cases = [
        (jax.random.normal(kx1, (2, in_channel, 16, 16), jnp.float32), False),
        (jax.random.normal(kx2, (8, in_channel, 16, 16), jnp.float32), True),
    ]

    for x, align in cases:
        out = seg_header_forward(x, params, net_h=net_h, net_w=net_w,
                                 align_corners=align)
        out = jax.block_until_ready(out)
        ref = _ref_forward(x, params, net_h=net_h, net_w=net_w,
                           align_corners=align)
        assert out.shape == (x.shape[0], out_channel, net_h, net_w), out.shape
        max_err = float(jnp.max(jnp.abs(out - ref)))
        # bf16 matmul operands with f32 accumulation through two matmul
        # stages -> tolerance sized for ~0.4% relative operand rounding.
        assert max_err < 3e-2, (x.shape, align, max_err)

    print("KERNEL_OK")
</pallas_src>

<mosaic_0001>
module attributes {stable_mosaic.version = 11 : i64} {
  func.func @_seg_head_kernel(%arg0: i32, %arg1: memref<16x64xbf16, #tpu.memory_space<vmem>>, %arg2: memref<64x768xbf16, #tpu.memory_space<vmem>>, %arg3: memref<32x48xbf16, #tpu.memory_space<vmem>>, %arg4: memref<1x256xf32, #tpu.memory_space<vmem>>, %arg5: memref<256x192xbf16, #tpu.memory_space<vmem>>, %arg6: memref<64x32xbf16, #tpu.memory_space<vmem>>, %arg7: memref<1x192xf32, #tpu.memory_space<vmem>>, %arg8: memref<64x192xf32, #tpu.memory_space<vmem>>, %arg9: memref<48x256xbf16, #tpu.memory_space<vmem>>) attributes {dimension_semantics = [#tpu.dimension_semantics<parallel>], iteration_bounds = array<i64: 2>, scalar_prefetch = 0 : i64, scratch_operands = 1 : i64, tpu.core_type = #tpu.core_type<tc>, window_params = [{transform_indices = @transform_0, window_bounds = array<i64: 16, 64>}, {pipeline_mode = #tpu.pipeline_mode<synchronous>, transform_indices = @transform_1, window_bounds = array<i64: 64, 768>}, {pipeline_mode = #tpu.pipeline_mode<synchronous>, transform_indices = @transform_2, window_bounds = array<i64: 32, 48>}, {pipeline_mode = #tpu.pipeline_mode<synchronous>, transform_indices = @transform_3, window_bounds = array<i64: 1, 256>}, {pipeline_mode = #tpu.pipeline_mode<synchronous>, transform_indices = @transform_4, window_bounds = array<i64: 256, 192>}, {pipeline_mode = #tpu.pipeline_mode<synchronous>, transform_indices = @transform_5, window_bounds = array<i64: 64, 32>}, {pipeline_mode = #tpu.pipeline_mode<synchronous>, transform_indices = @transform_6, window_bounds = array<i64: 1, 192>}, {transform_indices = @transform_7, window_bounds = array<i64: 64, 192>}]} {
    %c0 = arith.constant 0 : index
    %c0_0 = arith.constant 0 : index
    %0 = vector.load %arg1[%c0, %c0_0] : memref<16x64xbf16, #tpu.memory_space<vmem>>, vector<16x64xbf16>
    %c0_1 = arith.constant 0 : index
    %c0_2 = arith.constant 0 : index
    %1 = vector.load %arg2[%c0_1, %c0_2] : memref<64x768xbf16, #tpu.memory_space<vmem>>, vector<64x768xbf16>
    %cst = arith.constant dense<0.000000e+00> : vector<16x768xf32>
    %2 = tpu.matmul %0, %1, %cst {dimension_numbers = #tpu.dot_dimension_numbers<[1], [0], [0], [1], [0, 0, 1, 1], [], []>} : vector<16x64xbf16>, vector<64x768xbf16>, vector<16x768xf32> -> vector<16x768xf32>
    %3 = vector.extract_strided_slice %2 {offsets = [0, 0], sizes = [16, 256], strides = [1, 1]} : vector<16x768xf32> to vector<16x256xf32>
    %4 = arith.truncf %3 : vector<16x256xf32> to vector<16x256xbf16>
    %c0_3 = arith.constant 0 : index
    %c0_4 = arith.constant 0 : index
    %5 = vector.load %arg9[%c0_3, %c0_4] : memref<48x256xbf16, #tpu.memory_space<vmem>>, vector<16x256xbf16>
    tpu.vector_store %arg9[%c0_3, %c0_4], %4 {strides = array<i32>} : memref<48x256xbf16, #tpu.memory_space<vmem>>, vector<16x256xbf16>,
    %6 = vector.extract_strided_slice %2 {offsets = [0, 256], sizes = [16, 256], strides = [1, 1]} : vector<16x768xf32> to vector<16x256xf32>
    %7 = arith.truncf %6 : vector<16x256xf32> to vector<16x256xbf16>
    %c16 = arith.constant 16 : index
    %c0_5 = arith.constant 0 : index
    %8 = vector.load %arg9[%c16, %c0_5] : memref<48x256xbf16, #tpu.memory_space<vmem>>, vector<16x256xbf16>
    tpu.vector_store %arg9[%c16, %c0_5], %7 {strides = array<i32>} : memref<48x256xbf16, #tpu.memory_space<vmem>>, vector<16x256xbf16>,
    %9 = vector.extract_strided_slice %2 {offsets = [0, 512], sizes = [16, 256], strides = [1, 1]} : vector<16x768xf32> to vector<16x256xf32>
    %10 = arith.truncf %9 : vector<16x256xf32> to vector<16x256xbf16>
    %c32 = arith.constant 32 : index
    %c0_6 = arith.constant 0 : index
    %11 = vector.load %arg9[%c32, %c0_6] : memref<48x256xbf16, #tpu.memory_space<vmem>>, vector<16x256xbf16>
    tpu.vector_store %arg9[%c32, %c0_6], %10 {strides = array<i32>} : memref<48x256xbf16, #tpu.memory_space<vmem>>, vector<16x256xbf16>,
    %c0_7 = arith.constant 0 : index
    %c0_8 = arith.constant 0 : index
    %12 = vector.load %arg3[%c0_7, %c0_8] : memref<32x48xbf16, #tpu.memory_space<vmem>>, vector<32x48xbf16>
    %c0_9 = arith.constant 0 : index
    %c0_10 = arith.constant 0 : index
    %13 = vector.load %arg9[%c0_9, %c0_10] : memref<48x256xbf16, #tpu.memory_space<vmem>>, vector<48x256xbf16>
    %cst_11 = arith.constant dense<0.000000e+00> : vector<32x256xf32>
    %14 = tpu.matmul %12, %13, %cst_11 {dimension_numbers = #tpu.dot_dimension_numbers<[1], [0], [0], [1], [0, 0, 1, 1], [], []>} : vector<32x48xbf16>, vector<48x256xbf16>, vector<32x256xf32> -> vector<32x256xf32>
    %c0_12 = arith.constant 0 : index
    %c0_13 = arith.constant 0 : index
    %15 = vector.load %arg4[%c0_12, %c0_13] : memref<1x256xf32, #tpu.memory_space<vmem>>, vector<1x256xf32>
    %16 = vector.broadcast %15 : vector<1x256xf32> to vector<32x256xf32>
    %17 = arith.addf %14, %16 : vector<32x256xf32>
    %cst_14 = arith.constant 0.000000e+00 : f32
    %18 = vector.broadcast %cst_14 : f32 to vector<32x256xf32>
    %19 = arith.maximumf %17, %18 : vector<32x256xf32>
    %20 = arith.truncf %19 : vector<32x256xf32> to vector<32x256xbf16>
    %c0_15 = arith.constant 0 : index
    %c0_16 = arith.constant 0 : index
    %21 = vector.load %arg5[%c0_15, %c0_16] : memref<256x192xbf16, #tpu.memory_space<vmem>>, vector<256x192xbf16>
    %cst_17 = arith.constant dense<0.000000e+00> : vector<32x192xf32>
    %22 = tpu.matmul %20, %21, %cst_17 {dimension_numbers = #tpu.dot_dimension_numbers<[1], [0], [0], [1], [0, 0, 1, 1], [], []>} : vector<32x256xbf16>, vector<256x192xbf16>, vector<32x192xf32> -> vector<32x192xf32>
    %c0_18 = arith.constant 0 : index
    %c0_19 = arith.constant 0 : index
    %23 = vector.load %arg6[%c0_18, %c0_19] : memref<64x32xbf16, #tpu.memory_space<vmem>>, vector<64x32xbf16>
    %24 = arith.truncf %22 : vector<32x192xf32> to vector<32x192xbf16>
    %cst_20 = arith.constant dense<0.000000e+00> : vector<64x192xf32>
    %25 = tpu.matmul %23, %24, %cst_20 {dimension_numbers = #tpu.dot_dimension_numbers<[1], [0], [0], [1], [0, 0, 1, 1], [], []>} : vector<64x32xbf16>, vector<32x192xbf16>, vector<64x192xf32> -> vector<64x192xf32>
    %c0_21 = arith.constant 0 : index
    %c0_22 = arith.constant 0 : index
    %26 = vector.load %arg7[%c0_21, %c0_22] : memref<1x192xf32, #tpu.memory_space<vmem>>, vector<1x192xf32>
    %27 = vector.broadcast %26 : vector<1x192xf32> to vector<64x192xf32>
    %28 = arith.addf %25, %27 : vector<64x192xf32>
    %c0_23 = arith.constant 0 : index
    %c0_24 = arith.constant 0 : index
    %29 = vector.load %arg8[%c0_23, %c0_24] : memref<64x192xf32, #tpu.memory_space<vmem>>, vector<64x192xf32>
    tpu.vector_store %arg8[%c0_23, %c0_24], %28 {strides = array<i32>} : memref<64x192xf32, #tpu.memory_space<vmem>>, vector<64x192xf32>,
    return
  }
  func.func @transform_0(%arg0: i32) -> (i32, i32) {
    %c0_i32 = arith.constant 0 : i32
    %c0_i32_0 = arith.constant 0 : i32
    return %arg0, %c0_i32 : i32, i32
  }
  func.func @transform_1(%arg0: i32) -> (i32, i32) {
    %c0_i32 = arith.constant 0 : i32
    %c0_i32_0 = arith.constant 0 : i32
    %c0_i32_1 = arith.constant 0 : i32
    return %c0_i32, %c0_i32_0 : i32, i32
  }
  func.func @transform_2(%arg0: i32) -> (i32, i32) {
    %c0_i32 = arith.constant 0 : i32
    %c0_i32_0 = arith.constant 0 : i32
    %c0_i32_1 = arith.constant 0 : i32
    return %c0_i32, %c0_i32_0 : i32, i32
  }
  func.func @transform_3(%arg0: i32) -> (i32, i32) {
    %c0_i32 = arith.constant 0 : i32
    %c0_i32_0 = arith.constant 0 : i32
    %c0_i32_1 = arith.constant 0 : i32
    return %c0_i32, %c0_i32_0 : i32, i32
  }
  func.func @transform_4(%arg0: i32) -> (i32, i32) {
    %c0_i32 = arith.constant 0 : i32
    %c0_i32_0 = arith.constant 0 : i32
    %c0_i32_1 = arith.constant 0 : i32
    return %c0_i32, %c0_i32_0 : i32, i32
  }
  func.func @transform_5(%arg0: i32) -> (i32, i32) {
    %c0_i32 = arith.constant 0 : i32
    %c0_i32_0 = arith.constant 0 : i32
    %c0_i32_1 = arith.constant 0 : i32
    return %c0_i32, %c0_i32_0 : i32, i32
  }
  func.func @transform_6(%arg0: i32) -> (i32, i32) {
    %c0_i32 = arith.constant 0 : i32
    %c0_i32_0 = arith.constant 0 : i32
    %c0_i32_1 = arith.constant 0 : i32
    return %c0_i32, %c0_i32_0 : i32, i32
  }
  func.func @transform_7(%arg0: i32) -> (i32, i32) {
    %c0_i32 = arith.constant 0 : i32
    %c0_i32_0 = arith.constant 0 : i32
    return %arg0, %c0_i32 : i32, i32
  }
}

</mosaic_0001>

<llo_original>
// kernel: seg_header_forward.1
$region0: #{seg_header_forward.1}
  #allocation0 [shape = 'u32[]', space=smem, size = 0x4, offset = 0x4, fixed_abs, tag = 'smem constant byte address 0x4 - core index']
  #allocation1 [shape = 'u32[144,128]{1,0:T(1,128)}', space=vmem, size = 0x12000, scoped, tag = 'internal scratch']
  #allocation2 [shape = 'bf16[48,256]{1,0:T(16,128)(2,1)}', space=vmem, size = 0x6000, scoped, tag = 'scratch operand']
  %s0 = inlined_call_operand.vmem [shape: bf16[32,64], index: 0, kind: input, shape index: {}]
  %s1 = inlined_call_operand.vmem [shape: bf16[64,768], index: 1, kind: input, shape index: {}]
  %s2 = inlined_call_operand.vmem [shape: bf16[32,48], index: 2, kind: input, shape index: {}]
  %s3 = inlined_call_operand.vmem [shape: f32[1,256], index: 3, kind: input, shape index: {}]
  %s4 = inlined_call_operand.vmem [shape: bf16[256,192], index: 4, kind: input, shape index: {}]
  %s5 = inlined_call_operand.vmem [shape: bf16[64,32], index: 5, kind: input, shape index: {}]
  %s6 = inlined_call_operand.vmem [shape: f32[1,192], index: 6, kind: input, shape index: {}]
  %s7 = inlined_call_operand.vmem [shape: f32[128,192], index: 7, kind: output, shape index: {}]
  %s8 = sld [smem:[#allocation0]]
  $region61: #{seg_header_forward.1} parent=0
    _
  %s10 = ssub.s32 1, %s8
  %s11 = scalar_select 0, %s10, %s8
  loop: start=0, step=1, limit=4
  $region2: #{seg_header_forward.1} parent=0 // loop_pre_header
    _
  $region3: #{seg_header_forward.1} parent=0 // loop_header
    %s13 = sphi 0, %s17
    %p14 = scmp.ge.s32.totalorder %s13, 4
    %s23 = sphi 0, %s25
    %s26 = sphi 0, %s23
    %s27 = sphi 0, %s26
    %s43 = sphi 0, %s27
    %s47 = sphi 0, %s47
    %s49 = sphi 0, %s47
    %s50 = sphi 0, %s49
    %s64 = sphi 0, %s50
    %s68 = sphi 0, %s68
    %s70 = sphi 0, %s68
    %s71 = sphi 0, %s70
    %s85 = sphi 0, %s71
    %s89 = sphi 0, %s89
    %s91 = sphi 0, %s89
    %s92 = sphi 0, %s91
    %s106 = sphi 0, %s92
    %s110 = sphi 0, %s110
    %s112 = sphi 0, %s110
    %s113 = sphi 0, %s112
    %s127 = sphi 0, %s113
    %s131 = sphi 0, %s131
    %s133 = sphi 0, %s131
    %s134 = sphi 0, %s133
    %s148 = sphi 0, %s134
    %s152 = sphi 0, %s152
    %s154 = sphi 0, %s152
    %s155 = sphi 0, %s154
    %s169 = sphi 0, %s155
    %s175 = sphi 0, %s177
    %s178 = sphi 0, %s175
    %s179 = sphi 0, %s178
    %s195 = sphi 0, %s179
  $region4: #{seg_header_forward.1} parent=0 // loop_header_branch
    %16 = sbr.rel (%p14) target = $region8
  $region5: #{seg_header_forward.1} parent=0 // loop_body
    %s18 = ssub.s32 %s13, 1
    %s19 = ssub.s32 %s13, 2
    %s20 = sadd.s32 %s13, 1
    %s21 = ssub.s32 %s13, %s20
    %p22 = scmp.eq.s32.totalorder %s21, 0
    %s24 = sadd.s32 %s23, 1
    %s25 = scalar_select %p22, %s23, %s24
    %p28 = pneg %p22
    %p29 = scmp.eq.s32.totalorder %s13, 1
    %p30 = por %p28, %p29
    %p31 = scmp.ne.s32.totalorder %s23, %s26
    %p32 = scmp.eq.s32.totalorder %s13, 0
    %p33 = por %p31, %p32
    %p34 = scmp.ne.s32.totalorder %s23, %s26
    %p35 = scmp.eq.s32.totalorder %s18, 1
    %p36 = por %p34, %p35
    %p37 = scmp.ne.s32.totalorder %s26, %s27
    %p38 = scmp.eq.s32.totalorder %s18, 0
    %p39 = por %p37, %p38
    %p40 = scmp.ne.s32.totalorder %s26, %s27
    %p41 = scmp.eq.s32.totalorder %s19, 1
    %p42 = por %p40, %p41
    %p44 = scmp.ne.s32.totalorder %s27, %s43
    %p45 = scmp.eq.s32.totalorder %s19, 0
    %p46 = por %p44, %p45
    %s48 = sadd.s32 %s47, 1
    %p51 = scmp.eq.s32.totalorder %s13, 1
    %p52 = scmp.ne.s32.totalorder %s47, %s49
    %p53 = scmp.eq.s32.totalorder %s13, 0
    %p54 = por %p52, %p53
    %p55 = scmp.ne.s32.totalorder %s47, %s49
    %p56 = scmp.eq.s32.totalorder %s18, 1
    %p57 = por %p55, %p56
    %p58 = scmp.ne.s32.totalorder %s49, %s50
    %p59 = scmp.eq.s32.totalorder %s18, 0
    %p60 = por %p58, %p59
    %p61 = scmp.ne.s32.totalorder %s49, %s50
    %p62 = scmp.eq.s32.totalorder %s19, 1
    %p63 = por %p61, %p62
    %p65 = scmp.ne.s32.totalorder %s50, %s64
    %p66 = scmp.eq.s32.totalorder %s19, 0
    %p67 = por %p65, %p66
    %s69 = sadd.s32 %s68, 1
    %p72 = scmp.eq.s32.totalorder %s13, 1
    %p73 = scmp.ne.s32.totalorder %s68, %s70
    %p74 = scmp.eq.s32.totalorder %s13, 0
    %p75 = por %p73, %p74
    %p76 = scmp.ne.s32.totalorder %s68, %s70
    %p77 = scmp.eq.s32.totalorder %s18, 1
    %p78 = por %p76, %p77
    %p79 = scmp.ne.s32.totalorder %s70, %s71
    %p80 = scmp.eq.s32.totalorder %s18, 0
    %p81 = por %p79, %p80
    %p82 = scmp.ne.s32.totalorder %s70, %s71
    %p83 = scmp.eq.s32.totalorder %s19, 1
    %p84 = por %p82, %p83
    %p86 = scmp.ne.s32.totalorder %s71, %s85
    %p87 = scmp.eq.s32.totalorder %s19, 0
    %p88 = por %p86, %p87
    %s90 = sadd.s32 %s89, 1
    %p93 = scmp.eq.s32.totalorder %s13, 1
    %p94 = scmp.ne.s32.totalorder %s89, %s91
    %p95 = scmp.eq.s32.totalorder %s13, 0
    %p96 = por %p94, %p95
    %p97 = scmp.ne.s32.totalorder %s89, %s91
    %p98 = scmp.eq.s32.totalorder %s18, 1
    %p99 = por %p97, %p98
    %p100 = scmp.ne.s32.totalorder %s91, %s92
    %p101 = scmp.eq.s32.totalorder %s18, 0
    %p102 = por %p100, %p101
    %p103 = scmp.ne.s32.totalorder %s91, %s92
    %p104 = scmp.eq.s32.totalorder %s19, 1
    %p105 = por %p103, %p104
    %p107 = scmp.ne.s32.totalorder %s92, %s106
    %p108 = scmp.eq.s32.totalorder %s19, 0
    %p109 = por %p107, %p108
    %s111 = sadd.s32 %s110, 1
    %p114 = scmp.eq.s32.totalorder %s13, 1
    %p115 = scmp.ne.s32.totalorder %s110, %s112
    %p116 = scmp.eq.s32.totalorder %s13, 0
    %p117 = por %p115, %p116
    %p118 = scmp.ne.s32.totalorder %s110, %s112
    %p119 = scmp.eq.s32.totalorder %s18, 1
    %p120 = por %p118, %p119
    %p121 = scmp.ne.s32.totalorder %s112, %s113
    %p122 = scmp.eq.s32.totalorder %s18, 0
    %p123 = por %p121, %p122
    %p124 = scmp.ne.s32.totalorder %s112, %s113
    %p125 = scmp.eq.s32.totalorder %s19, 1
    %p126 = por %p124, %p125
    %p128 = scmp.ne.s32.totalorder %s113, %s127
    %p129 = scmp.eq.s32.totalorder %s19, 0
    %p130 = por %p128, %p129
    %s132 = sadd.s32 %s131, 1
    %p135 = scmp.eq.s32.totalorder %s13, 1
    %p136 = scmp.ne.s32.totalorder %s131, %s133
    %p137 = scmp.eq.s32.totalorder %s13, 0
    %p138 = por %p136, %p137
    %p139 = scmp.ne.s32.totalorder %s131, %s133
    %p140 = scmp.eq.s32.totalorder %s18, 1
    %p141 = por %p139, %p140
    %p142 = scmp.ne.s32.totalorder %s133, %s134
    %p143 = scmp.eq.s32.totalorder %s18, 0
    %p144 = por %p142, %p143
    %p145 = scmp.ne.s32.totalorder %s133, %s134
    %p146 = scmp.eq.s32.totalorder %s19, 1
    %p147 = por %p145, %p146
    %p149 = scmp.ne.s32.totalorder %s134, %s148
    %p150 = scmp.eq.s32.totalorder %s19, 0
    %p151 = por %p149, %p150
    %s153 = sadd.s32 %s152, 1
    %p156 = scmp.eq.s32.totalorder %s13, 1
    %p157 = scmp.ne.s32.totalorder %s152, %s154
    %p158 = scmp.eq.s32.totalorder %s13, 0
    %p159 = por %p157, %p158
    %p160 = scmp.ne.s32.totalorder %s152, %s154
    %p161 = scmp.eq.s32.totalorder %s18, 1
    %p162 = por %p160, %p161
    %p163 = scmp.ne.s32.totalorder %s154, %s155
    %p164 = scmp.eq.s32.totalorder %s18, 0
    %p165 = por %p163, %p164
    %p166 = scmp.ne.s32.totalorder %s154, %s155
    %p167 = scmp.eq.s32.totalorder %s19, 1
    %p168 = por %p166, %p167
    %p170 = scmp.ne.s32.totalorder %s155, %s169
    %p171 = scmp.eq.s32.totalorder %s19, 0
    %p172 = por %p170, %p171
    %s173 = ssub.s32 %s13, %s20
    %p174 = scmp.eq.s32.totalorder %s173, 0
    %s176 = sadd.s32 %s175, 1
    %s177 = scalar_select %p174, %s175, %s176
    %p180 = pneg %p174
    %p181 = scmp.eq.s32.totalorder %s13, 1
    %p182 = por %p180, %p181
    %p183 = scmp.ne.s32.totalorder %s175, %s178
    %p184 = scmp.eq.s32.totalorder %s13, 0
    %p185 = por %p183, %p184
    %p186 = scmp.ne.s32.totalorder %s175, %s178
    %p187 = scmp.eq.s32.totalorder %s18, 1
    %p188 = por %p186, %p187
    %p189 = scmp.ne.s32.totalorder %s178, %s179
    %p190 = scmp.eq.s32.totalorder %s18, 0
    %p191 = por %p189, %p190
    %p192 = scmp.ne.s32.totalorder %s178, %s179
    %p193 = scmp.eq.s32.totalorder %s19, 1
    %p194 = por %p192, %p193
    %p196 = scmp.ne.s32.totalorder %s179, %s195
    %p197 = scmp.eq.s32.totalorder %s19, 0
    %p198 = por %p196, %p197
    %p199 = scmp.le.s32.totalorder 1, %s13
    %p200 = scmp.lt.s32.totalorder %s13, 3
    %p201 = pnand %p199, %p200
    %p202 = pneg %p201
    // Predicated region
    $region9: #{seg_header_forward.1} parent=5 // pred_check
      _
    $region10: #{seg_header_forward.1} parent=5 // pred_check_branch
      %204 = sbr.rel (%p201) target = $region12
    $region11: #{seg_header_forward.1} parent=5 // pred_region
      %s205 = ssub.s32 %s13, 1
      // Predicated region
      $region13: #{seg_header_forward.1} parent=11 // pred_check
        %p206 = pneg %p60
      $region14: #{seg_header_forward.1} parent=11 // pred_check_branch
        %208 = sbr.rel (%p206) target = $region16
      $region15: #{seg_header_forward.1} parent=11 // pred_region
        _
      $region16: #{seg_header_forward.1} parent=11 // pred_fallthru
        _
      // Predicated region
      $region17: #{seg_header_forward.1} parent=11 // pred_check
        %p209 = pneg %p81
      $region18: #{seg_header_forward.1} parent=11 // pred_check_branch
        %211 = sbr.rel (%p209) target = $region20
      $region19: #{seg_header_forward.1} parent=11 // pred_region
        _
      $region20: #{seg_header_forward.1} parent=11 // pred_fallthru
        _
      // Predicated region
      $region21: #{seg_header_forward.1} parent=11 // pred_check
        %p212 = pneg %p102
      $region22: #{seg_header_forward.1} parent=11 // pred_check_branch
        %214 = sbr.rel (%p212) target = $region24
      $region23: #{seg_header_forward.1} parent=11 // pred_region
        _
      $region24: #{seg_header_forward.1} parent=11 // pred_fallthru
        _
      // Predicated region
      $region25: #{seg_header_forward.1} parent=11 // pred_check
        %p215 = pneg %p123
      $region26: #{seg_header_forward.1} parent=11 // pred_check_branch
        %217 = sbr.rel (%p215) target = $region28
      $region27: #{seg_header_forward.1} parent=11 // pred_region
        _
      $region28: #{seg_header_forward.1} parent=11 // pred_fallthru
        _
      // Predicated region
      $region29: #{seg_header_forward.1} parent=11 // pred_check
        %p218 = pneg %p144
      $region30: #{seg_header_forward.1} parent=11 // pred_check_branch
        %220 = sbr.rel (%p218) target = $region32
      $region31: #{seg_header_forward.1} parent=11 // pred_region
        _
      $region32: #{seg_header_forward.1} parent=11 // pred_fallthru
        _
      // Predicated region
      $region33: #{seg_header_forward.1} parent=11 // pred_check
        %p221 = pneg %p165
      $region34: #{seg_header_forward.1} parent=11 // pred_check_branch
        %223 = sbr.rel (%p221) target = $region36
      $region35: #{seg_header_forward.1} parent=11 // pred_region
        _
      $region36: #{seg_header_forward.1} parent=11 // pred_fallthru
        _
    $region12: #{seg_header_forward.1} parent=5 // pred_fallthru
      _
    %p224 = scmp.lt.s32.totalorder %s13, 2
    // Predicated region
    $region37: #{seg_header_forward.1} parent=5 // pred_check
      %p225 = pneg %p224
    $region38: #{seg_header_forward.1} parent=5 // pred_check_branch
      %227 = sbr.rel (%p225) target = $region40
    $region39: #{seg_header_forward.1} parent=5 // pred_region
      // Predicated region
      $region41: #{seg_header_forward.1} parent=39 // pred_check
        %p228 = pneg %p33
      $region42: #{seg_header_forward.1} parent=39 // pred_check_branch
        %230 = sbr.rel (%p228) target = $region44
      $region43: #{seg_header_forward.1} parent=39 // pred_region
        %s231 = smul.u32 2, %s13
        %p232 = scmp.lt.s32.totalorder %s231, 3
        %s233 = scalar_select %p232, %s231, 3
        %s234 = smul.addr %s233, 4
        %s235 = scalar_lea.vmem %s0, %s234
        %s236 = smul.u32 2, %s13
      $region44: #{seg_header_forward.1} parent=39 // pred_fallthru
        _
    $region40: #{seg_header_forward.1} parent=5 // pred_fallthru
      _
    %p237 = scmp.le.s32.totalorder 1, %s13
    %p238 = scmp.lt.s32.totalorder %s13, 3
    %p239 = pnand %p237, %p238
    %p240 = pneg %p239
    // Predicated region
    $region45: #{seg_header_forward.1} parent=5 // pred_check
      _
    $region46: #{seg_header_forward.1} parent=5 // pred_check_branch
      %242 = sbr.rel (%p239) target = $region48
    $region47: #{seg_header_forward.1} parent=5 // pred_region
      %s243 = ssub.s32 %s13, 1
      %s244 = smul.u32 2, %s18
      %p245 = scmp.lt.s32.totalorder %s244, 3
      %s246 = scalar_select %p245, %s244, 3
      %s247 = smul.addr %s246, 4
      %s248 = scalar_lea.vmem %s0, %s247
      %p249 = pneg %p39
      %p250 = pneg %p36
      %p251 = pneg %p60
      %p252 = pneg %p57
      %p253 = pneg %p81
      %p254 = pneg %p78
      %p255 = pneg %p102
      %p256 = pneg %p99
      %p257 = pneg %p123
      %p258 = pneg %p120
      %p259 = pneg %p144
      %p260 = pneg %p141
      %p261 = pneg %p165
      %p262 = pneg %p162
      %p263 = pneg %p191
      %p264 = pneg %p188
      %s265 = smul.u32 8, %s18
      %p266 = scmp.lt.s32.totalorder %s265, 15
      %s267 = scalar_select %p266, %s265, 15
      %s268 = smul.addr %s267, 2
      %s269 = smul.addr %s268, 8
      %s270 = scalar_lea.vmem %s7, %s269
      %s271 = smul.u32 2, %s18
      %p272 = scmp.lt.s32.totalorder %s271, 3
      %s273 = scalar_select %p272, %s271, 3
      %s274 = smul.addr %s273, 4
      %s275 = scalar_lea.vmem %s0, %s274
      %s276 = smul.u32 2, %s18
      %s277 = smul.u32 8, %s18
      %p278 = scmp.lt.s32.totalorder %s277, 15
      %s279 = scalar_select %p278, %s277, 15
      %s280 = smul.addr %s279, 2
      %s281 = smul.addr %s280, 8
      %s282 = scalar_lea.vmem %s7, %s281
      %s283 = smul.u32 8, %s18
      %v285 = vld [vmem:[%s275] sm:$0xf]
      %v286 = vld [vmem:[%s275 + $0x4] sm:$0xf]
      %v287 = vld [vmem:[%s1] sm:$0xff]
      %v288 = vld [vmem:[%s1 + $0x8] sm:$0xff]
      %v289 = vld [vmem:[%s1 + $0x10] sm:$0xff]
      %v290 = vld [vmem:[%s1 + $0x18] sm:$0xff]
      %v291 = vld [vmem:[%s1 + $0x20] sm:$0xff]
      %v292 = vld [vmem:[%s1 + $0x28] sm:$0xff]
      %v293 = vld [vmem:[%s1 + $0x30] sm:$0xff]
      %v294 = vld [vmem:[%s1 + $0x38] sm:$0xff]
      %v295 = vld [vmem:[%s1 + $0x40] sm:$0xff]
      %v296 = vld [vmem:[%s1 + $0x48] sm:$0xff]
      %v297 = vld [vmem:[%s1 + $0x50] sm:$0xff]
      %v298 = vld [vmem:[%s1 + $0x58] sm:$0xff]
      %v299 = vld [vmem:[%s1 + $0x60] sm:$0xff]
      %v300 = vld [vmem:[%s1 + $0x68] sm:$0xff]
      %v301 = vld [vmem:[%s1 + $0x70] sm:$0xff]
      %v302 = vld [vmem:[%s1 + $0x78] sm:$0xff]
      %v303 = vld [vmem:[%s1 + $0x80] sm:$0xff]
      %v304 = vld [vmem:[%s1 + $0x88] sm:$0xff]
      %v305 = vld [vmem:[%s1 + $0x90] sm:$0xff]
      %v306 = vld [vmem:[%s1 + $0x98] sm:$0xff]
      %v307 = vld [vmem:[%s1 + $0xa0] sm:$0xff]
      %v308 = vld [vmem:[%s1 + $0xa8] sm:$0xff]
      %v309 = vld [vmem:[%s1 + $0xb0] sm:$0xff]
      %v310 = vld [vmem:[%s1 + $0xb8] sm:$0xff]
      %v313 = vunpack.c.l.b16 %v285
      %v314 = vunpack.c.l.b16 %v286
      %v315 = vpack.c.b16 %v314, %v313
      %v340 = vunpack.c.l.b16 %v287
      %v341 = vunpack.c.h.b16 %v287
      %v342 = vunpack.c.l.b16 %v288
      %v343 = vunpack.c.h.b16 %v288
      %v344 = vunpack.c.l.b16 %v289
      %v345 = vunpack.c.h.b16 %v289
      %v346 = vunpack.c.l.b16 %v290
      %v347 = vunpack.c.h.b16 %v290
      %v348 = vunpack.c.l.b16 %v291
      %v349 = vunpack.c.h.b16 %v291
      %v350 = vunpack.c.l.b16 %v292
      %v351 = vunpack.c.h.b16 %v292
      %v352 = vunpack.c.l.b16 %v293
      %v353 = vunpack.c.h.b16 %v293
      %v354 = vunpack.c.l.b16 %v294
      %v355 = vunpack.c.h.b16 %v294
      %v356 = vunpack.c.l.b16 %v295
      %v357 = vunpack.c.h.b16 %v295
      %v358 = vunpack.c.l.b16 %v296
      %v359 = vunpack.c.h.b16 %v296
      %v360 = vunpack.c.l.b16 %v297
      %v361 = vunpack.c.h.b16 %v297
      %v362 = vunpack.c.l.b16 %v298
      %v363 = vunpack.c.h.b16 %v298
      %v364 = vunpack.c.l.b16 %v299
      %v365 = vunpack.c.h.b16 %v299
      %v366 = vunpack.c.l.b16 %v300
      %v367 = vunpack.c.h.b16 %v300
      %v368 = vunpack.c.l.b16 %v301
      %v369 = vunpack.c.h.b16 %v301
      %v370 = vunpack.c.l.b16 %v302
      %v371 = vunpack.c.h.b16 %v302
      %v372 = vunpack.c.l.b16 %v303
      %v373 = vunpack.c.h.b16 %v303
      %v374 = vunpack.c.l.b16 %v304
      %v375 = vunpack.c.h.b16 %v304
      %v376 = vunpack.c.l.b16 %v305
      %v377 = vunpack.c.h.b16 %v305
      %v378 = vunpack.c.l.b16 %v306
      %v379 = vunpack.c.h.b16 %v306
      %v380 = vunpack.c.l.b16 %v307
      %v381 = vunpack.c.h.b16 %v307
      %v382 = vunpack.c.l.b16 %v308
      %v383 = vunpack.c.h.b16 %v308
      %v384 = vunpack.c.l.b16 %v309
      %v385 = vunpack.c.h.b16 %v309
      %v386 = vunpack.c.l.b16 %v310
      %v387 = vunpack.c.h.b16 %v310
      %v388 = vpack.c.b16 %v346, %v340
      %v389 = vpack.c.b16 %v347, %v341
      %v390 = vpack.c.b16 %v348, %v342
      %v391 = vpack.c.b16 %v349, %v343
      %v392 = vpack.c.b16 %v350, %v344
      %v393 = vpack.c.b16 %v351, %v345
      %v394 = vpack.c.b16 %v358, %v352
      %v395 = vpack.c.b16 %v359, %v353
      %v396 = vpack.c.b16 %v360, %v354
      %v397 = vpack.c.b16 %v361, %v355
      %v398 = vpack.c.b16 %v362, %v356
      %v399 = vpack.c.b16 %v363, %v357
      %v400 = vpack.c.b16 %v370, %v364
      %v401 = vpack.c.b16 %v371, %v365
      %v402 = vpack.c.b16 %v372, %v366
      %v403 = vpack.c.b16 %v373, %v367
      %v404 = vpack.c.b16 %v374, %v368
      %v405 = vpack.c.b16 %v375, %v369
      %v406 = vpack.c.b16 %v382, %v376
      %v407 = vpack.c.b16 %v383, %v377
      %v408 = vpack.c.b16 %v384, %v378
      %v409 = vpack.c.b16 %v385, %v379
      %v410 = vpack.c.b16 %v386, %v380
      %v411 = vpack.c.b16 %v387, %v381
      %vm436 = vcmask 523264
      %v438 = vsel %vm436, %v315, 0
      %440 = vmatprep.subr.bf16.mxu0 %v389
      %441 = vmatpush1.bf16.msra.mxu0 %v388
      %442 = vmatprep.subr.bf16.mxu0 %v395
      %443 = vmatpush1.bf16.msra.mxu0 %v394
      %444 = vmatprep.subr.bf16.mxu0 %v401
      %445 = vmatpush1.bf16.msra.mxu0 %v400
      %446 = vmatprep.subr.bf16.mxu0 %v407
      %447 = vmatpush1.bf16.msra.mxu0 %v406
      %448 = vmatprep.subr.bf16.mxu0 0
      %449 = vmatpush1.bf16.msra.mxu0 0
      %450 = vmatprep.subr.bf16.mxu0 0
      %451 = vmatpush1.bf16.msra.mxu0 0
      %452 = vmatprep.subr.bf16.mxu0 0
      %453 = vmatpush1.bf16.msra.mxu0 0
      %454 = vmatprep.subr.bf16.mxu0 0
      %455 = vmatpush1.bf16.msra.mxu0 0
      %456 = vmatprep.subr.bf16.mxu0 0
      %457 = vmatpush1.bf16.msra.mxu0 0
      %458 = vmatprep.subr.bf16.mxu0 0
      %459 = vmatpush1.bf16.msra.mxu0 0
      %460 = vmatprep.subr.bf16.mxu0 0
      %461 = vmatpush1.bf16.msra.mxu0 0
      %462 = vmatprep.subr.bf16.mxu0 0
      %463 = vmatpush1.bf16.msra.mxu0 0
      %464 = vmatprep.subr.bf16.mxu0 0
      %465 = vmatpush1.bf16.msra.mxu0 0
      %466 = vmatprep.subr.bf16.mxu0 0
      %467 = vmatpush1.bf16.msra.mxu0 0
      %468 = vmatprep.subr.bf16.mxu0 0
      %469 = vmatpush1.bf16.msra.mxu0 0
      %470 = vmatprep.subr.bf16.mxu0 0
      %471 = vmatpush1.bf16.msra.mxu0 0
      %472 = vmatprep.mubr.bf16.mxu0 0
      %473 = vmatmul.mubr.bf16.gmra.mrb[0].mxu0 %v438
      %v474 = vpop.f32.mrb[0].mxu0
      %v475 = vadd.f32 0.0, %v474
      %v476 = vpop.f32.mrb[0].mxu0
      %v477 = vadd.f32 0.0, %v476
      %v478 = vpop.f32.mrb[0].mxu0
      %v479 = vadd.f32 0.0, %v478
      %v480 = vpop.f32.mrb[0].mxu0
      %v481 = vadd.f32 0.0, %v480
      %482 = vdwg.mxu0
      %483 = vmatprep.subr.bf16.mxu0 %v391
      %484 = vmatpush1.bf16.msra.mxu0 %v390
      %485 = vmatprep.subr.bf16.mxu0 %v397
      %486 = vmatpush1.bf16.msra.mxu0 %v396
      %487 = vmatprep.subr.bf16.mxu0 %v403
      %488 = vmatpush1.bf16.msra.mxu0 %v402
      %489 = vmatprep.subr.bf16.mxu0 %v409
      %490 = vmatpush1.bf16.msra.mxu0 %v408
      %491 = vmatprep.subr.bf16.mxu0 0
      %492 = vmatpush1.bf16.msra.mxu0 0
      %493 = vmatprep.subr.bf16.mxu0 0
      %494 = vmatpush1.bf16.msra.mxu0 0
      %495 = vmatprep.subr.bf16.mxu0 0
      %496 = vmatpush1.bf16.msra.mxu0 0
      %497 = vmatprep.subr.bf16.mxu0 0
      %498 = vmatpush1.bf16.msra.mxu0 0
      %499 = vmatprep.subr.bf16.mxu0 0
      %500 = vmatpush1.bf16.msra.mxu0 0
      %501 = vmatprep.subr.bf16.mxu0 0
      %502 = vmatpush1.bf16.msra.mxu0 0
      %503 = vmatprep.subr.bf16.mxu0 0
      %504 = vmatpush1.bf16.msra.mxu0 0
      %505 = vmatprep.subr.bf16.mxu0 0
      %506 = vmatpush1.bf16.msra.mxu0 0
      %507 = vmatprep.subr.bf16.mxu0 0
      %508 = vmatpush1.bf16.msra.mxu0 0
      %509 = vmatprep.subr.bf16.mxu0 0
      %510 = vmatpush1.bf16.msra.mxu0 0
      %511 = vmatprep.subr.bf16.mxu0 0
      %512 = vmatpush1.bf16.msra.mxu0 0
      %513 = vmatprep.subr.bf16.mxu0 0
      %514 = vmatpush1.bf16.msra.mxu0 0
      %515 = vmatprep.mubr.bf16.mxu0 0
      %516 = vmatmul.mubr.bf16.gmra.mrb[0].mxu0 %v438
      %v517 = vpop.f32.mrb[0].mxu0
      %v518 = vadd.f32 0.0, %v517
      %v519 = vpop.f32.mrb[0].mxu0
      %v520 = vadd.f32 0.0, %v519
      %v521 = vpop.f32.mrb[0].mxu0
      %v522 = vadd.f32 0.0, %v521
      %v523 = vpop.f32.mrb[0].mxu0
      %v524 = vadd.f32 0.0, %v523
      %525 = vdwg.mxu0
      %526 = vmatprep.subr.bf16.mxu0 %v393
      %527 = vmatpush1.bf16.msra.mxu0 %v392
      %528 = vmatprep.subr.bf16.mxu0 %v399
      %529 = vmatpush1.bf16.msra.mxu0 %v398
      %530 = vmatprep.subr.bf16.mxu0 %v405
      %531 = vmatpush1.bf16.msra.mxu0 %v404
      %532 = vmatprep.subr.bf16.mxu0 %v411
      %533 = vmatpush1.bf16.msra.mxu0 %v410
      %534 = vmatprep.subr.bf16.mxu0 0
      %535 = vmatpush1.bf16.msra.mxu0 0
      %536 = vmatprep.subr.bf16.mxu0 0
      %537 = vmatpush1.bf16.msra.mxu0 0
      %538 = vmatprep.subr.bf16.mxu0 0
      %539 = vmatpush1.bf16.msra.mxu0 0
      %540 = vmatprep.subr.bf16.mxu0 0
      %541 = vmatpush1.bf16.msra.mxu0 0
      %542 = vmatprep.subr.bf16.mxu0 0
      %543 = vmatpush1.bf16.msra.mxu0 0
      %544 = vmatprep.subr.bf16.mxu0 0
      %545 = vmatpush1.bf16.msra.mxu0 0
      %546 = vmatprep.subr.bf16.mxu0 0
      %547 = vmatpush1.bf16.msra.mxu0 0
      %548 = vmatprep.subr.bf16.mxu0 0
      %549 = vmatpush1.bf16.msra.mxu0 0
      %550 = vmatprep.subr.bf16.mxu0 0
      %551 = vmatpush1.bf16.msra.mxu0 0
      %552 = vmatprep.subr.bf16.mxu0 0
      %553 = vmatpush1.bf16.msra.mxu0 0
      %554 = vmatprep.subr.bf16.mxu0 0
      %555 = vmatpush1.bf16.msra.mxu0 0
      %556 = vmatprep.subr.bf16.mxu0 0
      %557 = vmatpush1.bf16.msra.mxu0 0
      %558 = vmatprep.mubr.bf16.mxu0 0
      %559 = vmatmul.mubr.bf16.gmra.mrb[0].mxu0 %v438
      %v560 = vpop.f32.mrb[0].mxu0
      %v561 = vadd.f32 0.0, %v560
      %v562 = vpop.f32.mrb[0].mxu0
      %v563 = vadd.f32 0.0, %v562
      %v564 = vpop.f32.mrb[0].mxu0
      %v565 = vadd.f32 0.0, %v564
      %v566 = vpop.f32.mrb[0].mxu0
      %v567 = vadd.f32 0.0, %v566
      %568 = vdwg.mxu0
      %v569 = vpack.c.bf16 %v479, %v475
      %v570 = vpack.c.bf16 %v481, %v477
      %571 = vst [vmem:[#allocation2] sm:$0xff] %v569
      %572 = vst [vmem:[#allocation2 + $0x8] sm:$0xff] %v570
      %v573 = vpack.c.bf16 %v522, %v518
      %v574 = vpack.c.bf16 %v524, %v520
      %575 = vst [vmem:[#allocation2 + $0x10] sm:$0xff] %v573
      %576 = vst [vmem:[#allocation2 + $0x18] sm:$0xff] %v574
      %v577 = vpack.c.bf16 %v565, %v561
      %v578 = vpack.c.bf16 %v567, %v563
      %579 = vst [vmem:[#allocation2 + $0x20] sm:$0xff] %v577
      %580 = vst [vmem:[#allocation2 + $0x28] sm:$0xff] %v578
      %v581 = vld [vmem:[%s2] sm:$0xf]
      %v582 = vld [vmem:[%s2 + $0x4] sm:$0xf]
      %v583 = vld [vmem:[%s2 + $0x8] sm:$0xf]
      %v584 = vld [vmem:[%s2 + $0xc] sm:$0xf]
      %v585 = vld [vmem:[#allocation2] sm:$0xff]
      %v586 = vld [vmem:[#allocation2 + $0x8] sm:$0xff]
      %v587 = vld [vmem:[#allocation2 + $0x10] sm:$0xff]
      %v588 = vld [vmem:[#allocation2 + $0x18] sm:$0xff]
      %v589 = vld [vmem:[#allocation2 + $0x20] sm:$0xff]
      %v590 = vld [vmem:[#allocation2 + $0x28] sm:$0xff]
      %v591 = vld [vmem:[%s3] sm:$0x3]
      %v593 = vlaneseq
      %v594 = vshrl.u32 %v593, 7
      %v595 = vsub.s32 0, %v594
      %v596 = vrot.slane %v591, %v595
      %v597 = vlaneseq
      %v598 = vshrl.u32 %v597, 7
      %v599 = vsub.s32 1, %v598
      %v600 = vrot.slane %v591, %v599
      %v607 = vunpack.c.l.b16 %v581
      %v608 = vunpack.c.l.b16 %v582
      %v609 = vunpack.c.l.b16 %v583
      %v610 = vunpack.c.l.b16 %v584
      %v611 = vpack.c.b16 %v608, %v607
      %v612 = vpack.c.b16 %v610, %v609
      %vm613 = vcmask 392192
      %v615 = vsel %vm613, %v611, 0
      %v618 = vsel %vm613, %v612, 0
      %620 = vmatprep.subr.bf16.mxu0 %v586
      %621 = vmatpush1.bf16.msra.mxu0 %v585
      %622 = vmatprep.subr.bf16.mxu0 %v588
      %623 = vmatpush1.bf16.msra.mxu0 %v587
      %624 = vmatprep.subr.bf16.mxu0 %v590
      %625 = vmatpush1.bf16.msra.mxu0 %v589
      %626 = vmatprep.subr.bf16.mxu0 0
      %627 = vmatpush1.bf16.msra.mxu0 0
      %628 = vmatprep.subr.bf16.mxu0 0
      %629 = vmatpush1.bf16.msra.mxu0 0
      %630 = vmatprep.subr.bf16.mxu0 0
      %631 = vmatpush1.bf16.msra.mxu0 0
      %632 = vmatprep.subr.bf16.mxu0 0
      %633 = vmatpush1.bf16.msra.mxu0 0
      %634 = vmatprep.subr.bf16.mxu0 0
      %635 = vmatpush1.bf16.msra.mxu0 0
      %636 = vmatprep.subr.bf16.mxu0 0
      %637 = vmatpush1.bf16.msra.mxu0 0
      %638 = vmatprep.subr.bf16.mxu0 0
      %639 = vmatpush1.bf16.msra.mxu0 0
      %640 = vmatprep.subr.bf16.mxu0 0
      %641 = vmatpush1.bf16.msra.mxu0 0
      %642 = vmatprep.subr.bf16.mxu0 0
      %643 = vmatpush1.bf16.msra.mxu0 0
      %644 = vmatprep.subr.bf16.mxu0 0
      %645 = vmatpush1.bf16.msra.mxu0 0
      %646 = vmatprep.subr.bf16.mxu0 0
      %647 = vmatpush1.bf16.msra.mxu0 0
      %648 = vmatprep.subr.bf16.mxu0 0
      %649 = vmatpush1.bf16.msra.mxu0 0
      %650 = vmatprep.subr.bf16.mxu0 0
      %651 = vmatpush1.bf16.msra.mxu0 0
      %652 = vmatprep.mubr.bf16.mxu0 0
      %653 = vmatmul.mubr.bf16.gmra.mrb[0].mxu0 %v615
      %v654 = vpop.f32.mrb[0].mxu0
      %v655 = vadd.f32 %v596, %v654
      %v656 = vpop.f32.mrb[0].mxu0
      %v657 = vadd.f32 %v600, %v656
      %v658 = vpop.f32.mrb[0].mxu0
      %v659 = vadd.f32 %v596, %v658
      %v660 = vpop.f32.mrb[0].mxu0
      %v661 = vadd.f32 %v600, %v660
      %662 = vmatprep.mubr.bf16.mxu0 0
      %663 = vmatmul.mubr.bf16.gmra.mrb[0].mxu0 %v618
      %v664 = vpop.f32.mrb[0].mxu0
      %v665 = vadd.f32 %v596, %v664
      %v666 = vpop.f32.mrb[0].mxu0
      %v667 = vadd.f32 %v600, %v666
      %v668 = vpop.f32.mrb[0].mxu0
      %v669 = vadd.f32 %v596, %v668
      %v670 = vpop.f32.mrb[0].mxu0
      %v671 = vadd.f32 %v600, %v670
      %672 = vdwg.mxu0
      %v673 = vmax.f32 %v655, 0.0
      %v674 = vmax.f32 %v657, 0.0
      %v675 = vmax.f32 %v659, 0.0
      %v676 = vmax.f32 %v661, 0.0
      %v677 = vmax.f32 %v665, 0.0
      %v678 = vmax.f32 %v667, 0.0
      %v679 = vmax.f32 %v669, 0.0
      %v680 = vmax.f32 %v671, 0.0
      %v681 = vpack.c.bf16 %v675, %v673
      %v682 = vpack.c.bf16 %v676, %v674
      %v683 = vpack.c.bf16 %v679, %v677
      %v684 = vpack.c.bf16 %v680, %v678
      %v685 = vld [vmem:[%s4] sm:$0xff]
      %v686 = vld [vmem:[%s4 + $0x8] sm:$0xff]
      %v687 = vld [vmem:[%s4 + $0x10] sm:$0xff]
      %v688 = vld [vmem:[%s4 + $0x18] sm:$0xff]
      %v689 = vld [vmem:[%s4 + $0x20] sm:$0xff]
      %v690 = vld [vmem:[%s4 + $0x28] sm:$0xff]
      %v691 = vld [vmem:[%s4 + $0x30] sm:$0xff]
      %v692 = vld [vmem:[%s4 + $0x38] sm:$0xff]
      %v693 = vld [vmem:[%s4 + $0x40] sm:$0xff]
      %v694 = vld [vmem:[%s4 + $0x48] sm:$0xff]
      %v695 = vld [vmem:[%s4 + $0x50] sm:$0xff]
      %v696 = vld [vmem:[%s4 + $0x58] sm:$0xff]
      %v697 = vld [vmem:[%s4 + $0x60] sm:$0xff]
      %v698 = vld [vmem:[%s4 + $0x68] sm:$0xff]
      %v699 = vld [vmem:[%s4 + $0x70] sm:$0xff]
      %v700 = vld [vmem:[%s4 + $0x78] sm:$0xff]
      %v701 = vld [vmem:[%s4 + $0x80] sm:$0xff]
      %v702 = vld [vmem:[%s4 + $0x88] sm:$0xff]
      %v703 = vld [vmem:[%s4 + $0x90] sm:$0xff]
      %v704 = vld [vmem:[%s4 + $0x98] sm:$0xff]
      %v705 = vld [vmem:[%s4 + $0xa0] sm:$0xff]
      %v706 = vld [vmem:[%s4 + $0xa8] sm:$0xff]
      %v707 = vld [vmem:[%s4 + $0xb0] sm:$0xff]
      %v708 = vld [vmem:[%s4 + $0xb8] sm:$0xff]
      %v709 = vld [vmem:[%s4 + $0xc0] sm:$0xff]
      %v710 = vld [vmem:[%s4 + $0xc8] sm:$0xff]
      %v711 = vld [vmem:[%s4 + $0xd0] sm:$0xff]
      %v712 = vld [vmem:[%s4 + $0xd8] sm:$0xff]
      %v713 = vld [vmem:[%s4 + $0xe0] sm:$0xff]
      %v714 = vld [vmem:[%s4 + $0xe8] sm:$0xff]
      %v715 = vld [vmem:[%s4 + $0xf0] sm:$0xff]
      %v716 = vld [vmem:[%s4 + $0xf8] sm:$0xff]
      %v749 = vunpack.c.l.b16 %v685
      %v750 = vunpack.c.h.b16 %v685
      %v751 = vunpack.c.l.b16 %v686
      %v752 = vunpack.c.h.b16 %v686
      %v753 = vunpack.c.l.b16 %v687
      %v754 = vunpack.c.h.b16 %v687
      %v755 = vunpack.c.l.b16 %v688
      %v756 = vunpack.c.h.b16 %v688
      %v757 = vunpack.c.l.b16 %v689
      %v758 = vunpack.c.h.b16 %v689
      %v759 = vunpack.c.l.b16 %v690
      %v760 = vunpack.c.h.b16 %v690
      %v761 = vunpack.c.l.b16 %v691
      %v762 = vunpack.c.h.b16 %v691
      %v763 = vunpack.c.l.b16 %v692
      %v764 = vunpack.c.h.b16 %v692
      %v765 = vunpack.c.l.b16 %v693
      %v766 = vunpack.c.h.b16 %v693
      %v767 = vunpack.c.l.b16 %v694
      %v768 = vunpack.c.h.b16 %v694
      %v769 = vunpack.c.l.b16 %v695
      %v770 = vunpack.c.h.b16 %v695
      %v771 = vunpack.c.l.b16 %v696
      %v772 = vunpack.c.h.b16 %v696
      %v773 = vunpack.c.l.b16 %v697
      %v774 = vunpack.c.h.b16 %v697
      %v775 = vunpack.c.l.b16 %v698
      %v776 = vunpack.c.h.b16 %v698
      %v777 = vunpack.c.l.b16 %v699
      %v778 = vunpack.c.h.b16 %v699
      %v779 = vunpack.c.l.b16 %v700
      %v780 = vunpack.c.h.b16 %v700
      %v781 = vunpack.c.l.b16 %v701
      %v782 = vunpack.c.h.b16 %v701
      %v783 = vunpack.c.l.b16 %v702
      %v784 = vunpack.c.h.b16 %v702
      %v785 = vunpack.c.l.b16 %v703
      %v786 = vunpack.c.h.b16 %v703
      %v787 = vunpack.c.l.b16 %v704
      %v788 = vunpack.c.h.b16 %v704
      %v789 = vunpack.c.l.b16 %v705
      %v790 = vunpack.c.h.b16 %v705
      %v791 = vunpack.c.l.b16 %v706
      %v792 = vunpack.c.h.b16 %v706
      %v793 = vunpack.c.l.b16 %v707
      %v794 = vunpack.c.h.b16 %v707
      %v795 = vunpack.c.l.b16 %v708
      %v796 = vunpack.c.h.b16 %v708
      %v797 = vunpack.c.l.b16 %v709
      %v798 = vunpack.c.h.b16 %v709
      %v799 = vunpack.c.l.b16 %v710
      %v800 = vunpack.c.h.b16 %v710
      %v801 = vunpack.c.l.b16 %v711
      %v802 = vunpack.c.h.b16 %v711
      %v803 = vunpack.c.l.b16 %v712
      %v804 = vunpack.c.h.b16 %v712
      %v805 = vunpack.c.l.b16 %v713
      %v806 = vunpack.c.h.b16 %v713
      %v807 = vunpack.c.l.b16 %v714
      %v808 = vunpack.c.h.b16 %v714
      %v809 = vunpack.c.l.b16 %v715
      %v810 = vunpack.c.h.b16 %v715
      %v811 = vunpack.c.l.b16 %v716
      %v812 = vunpack.c.h.b16 %v716
      %v813 = vpack.c.b16 %v751, %v749
      %v814 = vpack.c.b16 %v752, %v750
      %v815 = vpack.c.b16 %v755, %v753
      %v816 = vpack.c.b16 %v756, %v754
      %v817 = vpack.c.b16 %v759, %v757
      %v818 = vpack.c.b16 %v760, %v758
      %v819 = vpack.c.b16 %v763, %v761
      %v820 = vpack.c.b16 %v764, %v762
      %v821 = vpack.c.b16 %v767, %v765
      %v822 = vpack.c.b16 %v768, %v766
      %v823 = vpack.c.b16 %v771, %v769
      %v824 = vpack.c.b16 %v772, %v770
      %v825 = vpack.c.b16 %v775, %v773
      %v826 = vpack.c.b16 %v776, %v774
      %v827 = vpack.c.b16 %v779, %v777
      %v828 = vpack.c.b16 %v780, %v778
      %v829 = vpack.c.b16 %v783, %v781
      %v830 = vpack.c.b16 %v784, %v782
      %v831 = vpack.c.b16 %v787, %v785
      %v832 = vpack.c.b16 %v788, %v786
      %v833 = vpack.c.b16 %v791, %v789
      %v834 = vpack.c.b16 %v792, %v790
      %v835 = vpack.c.b16 %v795, %v793
      %v836 = vpack.c.b16 %v796, %v794
      %v837 = vpack.c.b16 %v799, %v797
      %v838 = vpack.c.b16 %v800, %v798
      %v839 = vpack.c.b16 %v803, %v801
      %v840 = vpack.c.b16 %v804, %v802
      %v841 = vpack.c.b16 %v807, %v805
      %v842 = vpack.c.b16 %v808, %v806
      %v843 = vpack.c.b16 %v811, %v809
      %v844 = vpack.c.b16 %v812, %v810
      %877 = vmatprep.subr.bf16.mxu0 %v814
      %878 = vmatpush1.bf16.msra.mxu0 %v813
      %879 = vmatprep.subr.bf16.mxu0 %v816
      %880 = vmatpush1.bf16.msra.mxu0 %v815
      %881 = vmatprep.subr.bf16.mxu0 %v818
      %882 = vmatpush1.bf16.msra.mxu0 %v817
      %883 = vmatprep.subr.bf16.mxu0 %v820
      %884 = vmatpush1.bf16.msra.mxu0 %v819
      %885 = vmatprep.subr.bf16.mxu0 %v822
      %886 = vmatpush1.bf16.msra.mxu0 %v821
      %887 = vmatprep.subr.bf16.mxu0 %v824
      %888 = vmatpush1.bf16.msra.mxu0 %v823
      %889 = vmatprep.subr.bf16.mxu0 %v826
      %890 = vmatpush1.bf16.msra.mxu0 %v825
      %891 = vmatprep.subr.bf16.mxu0 %v828
      %892 = vmatpush1.bf16.msra.mxu0 %v827
      %893 = vmatprep.subr.bf16.mxu0 %v830
      %894 = vmatpush1.bf16.msra.mxu0 %v829
      %895 = vmatprep.subr.bf16.mxu0 %v832
      %896 = vmatpush1.bf16.msra.mxu0 %v831
      %897 = vmatprep.subr.bf16.mxu0 %v834
      %898 = vmatpush1.bf16.msra.mxu0 %v833
      %899 = vmatprep.subr.bf16.mxu0 %v836
      %900 = vmatpush1.bf16.msra.mxu0 %v835
      %901 = vmatprep.subr.bf16.mxu0 %v838
      %902 = vmatpush1.bf16.msra.mxu0 %v837
      %903 = vmatprep.subr.bf16.mxu0 %v840
      %904 = vmatpush1.bf16.msra.mxu0 %v839
      %905 = vmatprep.subr.bf16.mxu0 %v842
      %906 = vmatpush1.bf16.msra.mxu0 %v841
      %907 = vmatprep.subr.bf16.mxu0 %v844
      %908 = vmatpush1.bf16.msra.mxu0 %v843
      %909 = vmatprep.mubr.bf16.mxu0 %v682
      %910 = vmatmul.mubr.bf16.gmra.mrb[0].mxu0 %v681
      %v911 = vpop.f32.mrb[0].mxu0
      %v912 = vadd.f32 0.0, %v911
      %v913 = vpop.f32.mrb[0].mxu0
      %v914 = vadd.f32 0.0, %v913
      %v915 = vpop.f32.mrb[0].mxu0
      %v916 = vadd.f32 0.0, %v915
      %v917 = vpop.f32.mrb[0].mxu0
      %v918 = vadd.f32 0.0, %v917
      %919 = vmatprep.mubr.bf16.mxu0 %v684
      %920 = vmatmul.mubr.bf16.gmra.mrb[0].mxu0 %v683
      %v921 = vpop.f32.mrb[0].mxu0
      %v922 = vadd.f32 0.0, %v921
      %v923 = vpop.f32.mrb[0].mxu0
      %v924 = vadd.f32 0.0, %v923
      %v925 = vpop.f32.mrb[0].mxu0
      %v926 = vadd.f32 0.0, %v925
      %v927 = vpop.f32.mrb[0].mxu0
      %v928 = vadd.f32 0.0, %v927
      %929 = vdwg.mxu0
      %v930 = vld [vmem:[%s5] sm:$0xf]
      %v931 = vld [vmem:[%s5 + $0x4] sm:$0xf]
      %v932 = vld [vmem:[%s5 + $0x8] sm:$0xf]
      %v933 = vld [vmem:[%s5 + $0xc] sm:$0xf]
      %v934 = vld [vmem:[%s5 + $0x10] sm:$0xf]
      %v935 = vld [vmem:[%s5 + $0x14] sm:$0xf]
      %v936 = vld [vmem:[%s5 + $0x18] sm:$0xf]
      %v937 = vld [vmem:[%s5 + $0x1c] sm:$0xf]
      %v938 = vpack.c.bf16 %v916, %v912
      %v939 = vpack.c.bf16 %v918, %v914
      %v940 = vpack.c.bf16 %v926, %v922
      %v941 = vpack.c.bf16 %v928, %v924
      %v942 = vld [vmem:[%s6] sm:$0x3]
      %v944 = vlaneseq
      %v945 = vshrl.u32 %v944, 7
      %v946 = vsub.s32 0, %v945
      %v947 = vrot.slane %v942, %v946
      %v948 = vlaneseq
      %v949 = vshrl.u32 %v948, 7
      %v950 = vsub.s32 1, %v949
      %v951 = vrot.slane %v942, %v950
      %v962 = vunpack.c.l.b16 %v930
      %v963 = vunpack.c.l.b16 %v931
      %v964 = vunpack.c.l.b16 %v932
      %v965 = vunpack.c.l.b16 %v933
      %v966 = vunpack.c.l.b16 %v934
      %v967 = vunpack.c.l.b16 %v935
      %v968 = vunpack.c.l.b16 %v936
      %v969 = vunpack.c.l.b16 %v937
      %v970 = vpack.c.b16 %v963, %v962
      %v971 = vpack.c.b16 %v965, %v964
      %v972 = vpack.c.b16 %v967, %v966
      %v973 = vpack.c.b16 %v969, %v968
      %vm974 = vcmask 261120
      %v976 = vsel %vm974, %v970, 0
      %v979 = vsel %vm974, %v971, 0
      %v982 = vsel %vm974, %v972, 0
      %v985 = vsel %vm974, %v973, 0
      %987 = vmatprep.subr.bf16.mxu0 %v939
      %988 = vmatpush1.bf16.msra.mxu0 %v938
      %989 = vmatprep.subr.bf16.mxu0 %v941
      %990 = vmatpush1.bf16.msra.mxu0 %v940
      %991 = vmatprep.subr.bf16.mxu0 0
      %992 = vmatpush1.bf16.msra.mxu0 0
      %993 = vmatprep.subr.bf16.mxu0 0
      %994 = vmatpush1.bf16.msra.mxu0 0
      %995 = vmatprep.subr.bf16.mxu0 0
      %996 = vmatpush1.bf16.msra.mxu0 0
      %997 = vmatprep.subr.bf16.mxu0 0
      %998 = vmatpush1.bf16.msra.mxu0 0
      %999 = vmatprep.subr.bf16.mxu0 0
      %1000 = vmatpush1.bf16.msra.mxu0 0
      %1001 = vmatprep.subr.bf16.mxu0 0
      %1002 = vmatpush1.bf16.msra.mxu0 0
      %1003 = vmatprep.subr.bf16.mxu0 0
      %1004 = vmatpush1.bf16.msra.mxu0 0
      %1005 = vmatprep.subr.bf16.mxu0 0
      %1006 = vmatpush1.bf16.msra.mxu0 0
      %1007 = vmatprep.subr.bf16.mxu0 0
      %1008 = vmatpush1.bf16.msra.mxu0 0
      %1009 = vmatprep.subr.bf16.mxu0 0
      %1010 = vmatpush1.bf16.msra.mxu0 0
      %1011 = vmatprep.subr.bf16.mxu0 0
      %1012 = vmatpush1.bf16.msra.mxu0 0
      %1013 = vmatprep.subr.bf16.mxu0 0
      %1014 = vmatpush1.bf16.msra.mxu0 0
      %1015 = vmatprep.subr.bf16.mxu0 0
      %1016 = vmatpush1.bf16.msra.mxu0 0
      %1017 = vmatprep.subr.bf16.mxu0 0
      %1018 = vmatpush1.bf16.msra.mxu0 0
      %1019 = vmatprep.mubr.bf16.mxu0 0
      %1020 = vmatmul.mubr.bf16.gmra.mrb[0].mxu0 %v976
      %v1021 = vpop.f32.mrb[0].mxu0
      %v1022 = vadd.f32 %v947, %v1021
      %v1023 = vpop.f32.mrb[0].mxu0
      %v1024 = vadd.f32 %v951, %v1023
      %v1025 = vpop.f32.mrb[0].mxu0
      %v1026 = vadd.f32 %v947, %v1025
      %v1027 = vpop.f32.mrb[0].mxu0
      %v1028 = vadd.f32 %v951, %v1027
      %1029 = vmatprep.mubr.bf16.mxu0 0
      %1030 = vmatmul.mubr.bf16.gmra.mrb[0].mxu0 %v979
      %v1031 = vpop.f32.mrb[0].mxu0
      %v1032 = vadd.f32 %v947, %v1031
      %v1033 = vpop.f32.mrb[0].mxu0
      %v1034 = vadd.f32 %v951, %v1033
      %v1035 = vpop.f32.mrb[0].mxu0
      %v1036 = vadd.f32 %v947, %v1035
      %v1037 = vpop.f32.mrb[0].mxu0
      %v1038 = vadd.f32 %v951, %v1037
      %1039 = vmatprep.mubr.bf16.mxu0 0
      %1040 = vmatmul.mubr.bf16.gmra.mrb[0].mxu0 %v982
      %v1041 = vpop.f32.mrb[0].mxu0
      %v1042 = vadd.f32 %v947, %v1041
      %v1043 = vpop.f32.mrb[0].mxu0
      %v1044 = vadd.f32 %v951, %v1043
      %v1045 = vpop.f32.mrb[0].mxu0
      %v1046 = vadd.f32 %v947, %v1045
      %v1047 = vpop.f32.mrb[0].mxu0
      %v1048 = vadd.f32 %v951, %v1047
      %1049 = vmatprep.mubr.bf16.mxu0 0
      %1050 = vmatmul.mubr.bf16.gmra.mrb[0].mxu0 %v985
      %v1051 = vpop.f32.mrb[0].mxu0
      %v1052 = vadd.f32 %v947, %v1051
      %v1053 = vpop.f32.mrb[0].mxu0
      %v1054 = vadd.f32 %v951, %v1053
      %v1055 = vpop.f32.mrb[0].mxu0
      %v1056 = vadd.f32 %v947, %v1055
      %v1057 = vpop.f32.mrb[0].mxu0
      %v1058 = vadd.f32 %v951, %v1057
      %1059 = vdwg.mxu0
      %1060 = vst [vmem:[%s282] sm:$0xff] %v1022
      %1061 = vst.msk [vmem:[%s282 + $0x8] sm:$0xff] %vm436, %v1024
      %1062 = vst [vmem:[%s282 + $0x10] sm:$0xff] %v1026
      %1063 = vst.msk [vmem:[%s282 + $0x18] sm:$0xff] %vm436, %v1028
      %1064 = vst [vmem:[%s282 + $0x20] sm:$0xff] %v1032
      %1065 = vst.msk [vmem:[%s282 + $0x28] sm:$0xff] %vm436, %v1034
      %1066 = vst [vmem:[%s282 + $0x30] sm:$0xff] %v1036
      %1067 = vst.msk [vmem:[%s282 + $0x38] sm:$0xff] %vm436, %v1038
      %1068 = vst [vmem:[%s282 + $0x40] sm:$0xff] %v1042
      %1069 = vst.msk [vmem:[%s282 + $0x48] sm:$0xff] %vm436, %v1044
      %1070 = vst [vmem:[%s282 + $0x50] sm:$0xff] %v1046
      %1071 = vst.msk [vmem:[%s282 + $0x58] sm:$0xff] %vm436, %v1048
      %1072 = vst [vmem:[%s282 + $0x60] sm:$0xff] %v1052
      %1073 = vst.msk [vmem:[%s282 + $0x68] sm:$0xff] %vm436, %v1054
      %1074 = vst [vmem:[%s282 + $0x70] sm:$0xff] %v1056
      %1075 = vst.msk [vmem:[%s282 + $0x78] sm:$0xff] %vm436, %v1058
      %s1076 = smul.u32 8, %s18
      %p1077 = scmp.lt.s32.totalorder %s1076, 15
      %s1078 = scalar_select %p1077, %s1076, 15
      %s1079 = smul.addr %s1078, 2
      %s1080 = smul.addr %s1079, 8
      %s1081 = scalar_lea.vmem %s7, %s1080
      // Predicated region
      $region49: #{seg_header_forward.1} parent=47 // pred_check
        %p1082 = pneg %p188
      $region50: #{seg_header_forward.1} parent=47 // pred_check_branch
        %1084 = sbr.rel (%p1082) target = $region52
      $region51: #{seg_header_forward.1} parent=47 // pred_region
        %s1085 = smul.u32 8, %s18
      $region52: #{seg_header_forward.1} parent=47 // pred_fallthru
        _
    $region48: #{seg_header_forward.1} parent=5 // pred_fallthru
      _
    %p1086 = scmp.le.s32.totalorder 2, %s13
    // Predicated region
    $region53: #{seg_header_forward.1} parent=5 // pred_check
      %p1087 = pneg %p1086
    $region54: #{seg_header_forward.1} parent=5 // pred_check_branch
      %1089 = sbr.rel (%p1087) target = $region56
    $region55: #{seg_header_forward.1} parent=5 // pred_region
      %s1090 = ssub.s32 %s13, 2
      // Predicated region
      $region57: #{seg_header_forward.1} parent=55 // pred_check
        %p1091 = pneg %p194
      $region58: #{seg_header_forward.1} parent=55 // pred_check_branch
        %1093 = sbr.rel (%p1091) target = $region60
      $region59: #{seg_header_forward.1} parent=55 // pred_region
        %s1094 = smul.u32 8, %s19
        %p1095 = scmp.lt.s32.totalorder %s1094, 15
        %s1096 = scalar_select %p1095, %s1094, 15
        %s1097 = smul.addr %s1096, 2
        %s1098 = smul.addr %s1097, 8
        %s1099 = scalar_lea.vmem %s7, %s1098
      $region60: #{seg_header_forward.1} parent=55 // pred_fallthru
        _
    $region56: #{seg_header_forward.1} parent=5 // pred_fallthru
      _
  $region6: #{seg_header_forward.1} parent=0 // loop_footer
    %s17 = sadd.s32 1, %s13
  $region7: #{seg_header_forward.1} parent=0 // loop_footer_branch
    %12 = sbr.rel target = $region3
  $region8: #{seg_header_forward.1} parent=0 // loop_exit
    _

</llo_original>
